<compile_context>
chip_gen: v5e
topology: v5e:2x2
jax: 0.10.0
libtpu: 0.0.40
codegen_flags: <defaults>
</compile_context>

<pallas_src>
import jax
import jax.numpy as jnp
from jax.experimental import pallas as pl
from jax.experimental.pallas import tpu as pltpu


def _autoencoder_kernel(x_ref,
                        w1_ref, b1_ref, w2_ref, b2_ref, w3_ref, b3_ref,
                        w4_ref, b4_ref, w5_ref, b5_ref, w6_ref, b6_ref,
                        o_ref):
    """Fused 6-layer MLP autoencoder forward for one batch tile.

    encoder: dim -> 128 -> 64 -> bottleneck   (ReLU after each)
    decoder: bottleneck -> 64 -> 128 -> dim   (ReLU after first two, none on last)

    Weights and the incoming activations are bf16 (MXU-native). Accumulation,
    bias add and ReLU are f32; each hidden layer hands a bf16 activation to the
    next layer (same rounding order as casting the LHS just before the dot).
    """
    def hidden(z_bf16, w_ref, b_ref):
        y = jnp.dot(z_bf16, w_ref[...], preferred_element_type=jnp.float32)
        y = y + b_ref[...]
        return jnp.maximum(y, 0.0).astype(jnp.bfloat16)

    z = x_ref[...]                                   # (tile, dim_p) bf16, lane-dense
    # encoder
    z = hidden(z, w1_ref, b1_ref)
    z = hidden(z, w2_ref, b2_ref)
    z = hidden(z, w3_ref, b3_ref)
    # decoder
    z = hidden(z, w4_ref, b4_ref)
    z = hidden(z, w5_ref, b5_ref)
    y = jnp.dot(z, w6_ref[...], preferred_element_type=jnp.float32) + b6_ref[...]
    o_ref[...] = y.astype(o_ref.dtype)               # (tile, dim); masked vst if dim < 128


def _round_up(n, m):
    return ((n + m - 1) // m) * m


def _cdiv(a, b):
    return (a + b - 1) // b


def _vmem_budget():
    """(vmem_limit_bytes, tile_guard_bytes), generation-aware.

    v5e/v6e have 128 MiB physical VMEM -> allow a 64 MiB scoped limit and a
    48 MiB tile guard; v7x only has 64 MiB -> keep the tighter 32/24 MiB caps.
    """
    try:
        cap = int(getattr(pltpu.get_tpu_info(), "vmem_capacity_bytes", 64 << 20))
    except Exception:   # hardware query unavailable -> be conservative (v7x-sized)
        cap = 64 << 20
    if cap >= (128 << 20):
        return 64 << 20, 48 << 20
    return 32 << 20, 24 << 20


def _pick_batch_tile(B, dim, dim_p, tile_guard_bytes):
    """Rows per grid step.

    * B <= 128: one full block (no batch padding, no masking; overhead-bound).
    * B  > 128: at least 2 grid steps so v7x's two TensorCores both get work,
      tiles as large as the VMEM guard allows (up to 2048 rows) to amortize the
      ~0.35us per-step pipeline overhead. Hidden widths are <= 128 so the
      kernel is HBM/overhead-bound, not MXU-bound -> bytes and step count are
      what matter.
    """
    # Streamed per-row bytes: double-buffered bf16 x-in + f32 out, plus live
    # f32/bf16 intermediates (all widths <= 128).
    bytes_per_row = 2 * (2 * dim_p + 4 * dim) + 2048
    max_tile = max(16, min(2048, (tile_guard_bytes // bytes_per_row) // 16 * 16))
    if B <= 128:
        return B
    tile = _round_up(_cdiv(B, 2), 16)
    return min(tile, max_tile)


def fc_autonet_forward(x, params, *, batch_tile=None):
    """x: (B, dim) float32.  params: list of (W, b) with W shaped (in, out), b (1, out)."""
    B, dim = x.shape
    dim_p = _round_up(max(dim, 128), 128)            # lane-dense input feature dim
    vmem_limit, tile_guard = _vmem_budget()

    if batch_tile is None:
        batch_tile = _pick_batch_tile(B, dim, dim_p, tile_guard)

    if batch_tile >= B:
        # Single grid step: the block covers the full (unpadded) batch.
        batch_tile = B
        B_pad = B
    else:
        # Multi-step: keep the tile sublane-safe for bf16 (16) and f32 (8) blocks.
        batch_tile = max(16, (batch_tile // 16) * 16)
        B_pad = _round_up(B, batch_tile)
    grid = (B_pad // batch_tile,)

    # Ragged batch + lane-dense input feature padding, fused with the bf16 cast
    # (the kernel consumes bf16 LHS anyway -> halves the streamed x bytes).
    pad_rows = B_pad - B
    pad_cols = dim_p - dim
    if pad_rows or pad_cols:
        x_p = jnp.pad(x, ((0, pad_rows), (0, pad_cols))).astype(jnp.bfloat16)
    else:
        x_p = x.astype(jnp.bfloat16)

    # Pad only W1's rows to dim_p (zeros contribute exactly 0). W6 cols / b6 are
    # left at `dim` so the output is written unpadded. Weights bf16, biases f32.
    params_p = []
    for li, (w, b) in enumerate(params):
        if li == 0 and pad_cols:
            w = jnp.pad(w, ((0, pad_cols), (0, 0)))
        params_p.append((w.astype(jnp.bfloat16), b.astype(jnp.float32)))
    weight_args = [a for wb in params_p for a in wb]

    # Grid-invariant weight/bias operands: constant index_map -> fetched once and
    # kept resident across the batch grid (no per-step re-DMA).
    in_specs = [pl.BlockSpec((batch_tile, dim_p), lambda i: (i, 0))]
    for arr in weight_args:
        in_specs.append(pl.BlockSpec(arr.shape, lambda i: (0, 0)))

    out_shape = jax.ShapeDtypeStruct((B_pad, dim), x.dtype)
    out_specs = pl.BlockSpec((batch_tile, dim), lambda i: (i, 0))

    flops = sum(2 * B_pad * w.shape[0] * w.shape[1] for w, _ in params_p)
    bytes_accessed = (x_p.size * x_p.dtype.itemsize          # bf16 x read
                      + B_pad * dim * x.dtype.itemsize       # f32 out write
                      + sum(a.size * a.dtype.itemsize for a in weight_args))
    cost = pl.CostEstimate(flops=int(flops), transcendentals=0,
                           bytes_accessed=int(bytes_accessed))

    out_p = pl.pallas_call(
        _autoencoder_kernel,
        out_shape=out_shape,
        grid_spec=pltpu.PrefetchScalarGridSpec(
            num_scalar_prefetch=0,
            grid=grid,
            in_specs=in_specs,
            out_specs=out_specs,
        ),
        compiler_params=pltpu.CompilerParams(
            dimension_semantics=("parallel",),
            vmem_limit_bytes=vmem_limit,
        ),
        cost_estimate=cost,
    )(x_p, *weight_args)

    return out_p if B_pad == B else out_p[:B]


def init_fc_autonet_params(key, dim, bottleneck):
    """Deterministic synthetic parameters. W stored as (in, out), b as (1, out)."""
    layer_dims = [(dim, 128), (128, 64), (64, bottleneck),
                  (bottleneck, 64), (64, 128), (128, dim)]
    params = []
    for (fan_in, fan_out) in layer_dims:
        key, kw, kb = jax.random.split(key, 3)
        bound = 1.0 / jnp.sqrt(fan_in)  # mimics PyTorch nn.Linear default init range
        w = jax.random.uniform(kw, (fan_in, fan_out), jnp.float32, -bound, bound)
        b = jax.random.uniform(kb, (1, fan_out), jnp.float32, -bound, bound)
        params.append((w, b))
    return params


def fc_autonet_reference(x, params, *, mxu_bf16=True):
    """Pure-JAX reference. mxu_bf16=True mirrors the kernel's bf16-input / f32-accum dots."""
    z = x
    for li, (w, b) in enumerate(params):
        if mxu_bf16:
            z = jnp.dot(z.astype(jnp.bfloat16), w.astype(jnp.bfloat16),
                        preferred_element_type=jnp.float32) + b
        else:
            z = z @ w + b
        if li != len(params) - 1:
            z = jnp.maximum(z, 0.0)
    return z


if __name__ == "__main__":
    dim = 32
    bottleneck = 16
    batch = 8

    key = jax.random.PRNGKey(0)
    key, kx = jax.random.split(key)
    x = jax.random.normal(kx, (batch, dim), jnp.float32)
    params = init_fc_autonet_params(key, dim, bottleneck)

    out = fc_autonet_forward(x, params)
    out = jax.block_until_ready(out)
    assert out.shape == (batch, dim)

    # Exact-path check against a reference that mirrors the kernel's bf16 MXU inputs.
    ref_bf16 = fc_autonet_reference(x, params, mxu_bf16=True)
    assert jnp.allclose(out, ref_bf16, atol=1e-3, rtol=1e-3), "mismatch vs bf16-matmul reference"

    # Sanity check against the full-f32 reference (bf16 inputs cost ~1e-2 relative).
    ref_f32 = fc_autonet_reference(x, params, mxu_bf16=False)
    assert jnp.allclose(out, ref_f32, atol=5e-2, rtol=5e-2), "drifted too far from f32 reference"

    print("KERNEL_OK")
</pallas_src>

<mosaic_0001>
module attributes {stable_mosaic.version = 11 : i64} {
  func.func @_autoencoder_kernel(%arg0: i32, %arg1: memref<8x128xbf16, #tpu.memory_space<vmem>>, %arg2: memref<128x128xbf16, #tpu.memory_space<vmem>>, %arg3: memref<1x128xf32, #tpu.memory_space<vmem>>, %arg4: memref<128x64xbf16, #tpu.memory_space<vmem>>, %arg5: memref<1x64xf32, #tpu.memory_space<vmem>>, %arg6: memref<64x16xbf16, #tpu.memory_space<vmem>>, %arg7: memref<1x16xf32, #tpu.memory_space<vmem>>, %arg8: memref<16x64xbf16, #tpu.memory_space<vmem>>, %arg9: memref<1x64xf32, #tpu.memory_space<vmem>>, %arg10: memref<64x128xbf16, #tpu.memory_space<vmem>>, %arg11: memref<1x128xf32, #tpu.memory_space<vmem>>, %arg12: memref<128x32xbf16, #tpu.memory_space<vmem>>, %arg13: memref<1x32xf32, #tpu.memory_space<vmem>>, %arg14: memref<8x32xf32, #tpu.memory_space<vmem>>) attributes {dimension_semantics = [#tpu.dimension_semantics<parallel>], iteration_bounds = array<i64: 1>, scalar_prefetch = 0 : i64, scratch_operands = 0 : i64, tpu.core_type = #tpu.core_type<tc>, window_params = [{transform_indices = @transform_0, window_bounds = array<i64: 8, 128>}, {pipeline_mode = #tpu.pipeline_mode<synchronous>, transform_indices = @transform_1, window_bounds = array<i64: 128, 128>}, {pipeline_mode = #tpu.pipeline_mode<synchronous>, transform_indices = @transform_2, window_bounds = array<i64: 1, 128>}, {pipeline_mode = #tpu.pipeline_mode<synchronous>, transform_indices = @transform_3, window_bounds = array<i64: 128, 64>}, {pipeline_mode = #tpu.pipeline_mode<synchronous>, transform_indices = @transform_4, window_bounds = array<i64: 1, 64>}, {pipeline_mode = #tpu.pipeline_mode<synchronous>, transform_indices = @transform_5, window_bounds = array<i64: 64, 16>}, {pipeline_mode = #tpu.pipeline_mode<synchronous>, transform_indices = @transform_6, window_bounds = array<i64: 1, 16>}, {pipeline_mode = #tpu.pipeline_mode<synchronous>, transform_indices = @transform_7, window_bounds = array<i64: 16, 64>}, {pipeline_mode = #tpu.pipeline_mode<synchronous>, transform_indices = @transform_8, window_bounds = array<i64: 1, 64>}, {pipeline_mode = #tpu.pipeline_mode<synchronous>, transform_indices = @transform_9, window_bounds = array<i64: 64, 128>}, {pipeline_mode = #tpu.pipeline_mode<synchronous>, transform_indices = @transform_10, window_bounds = array<i64: 1, 128>}, {pipeline_mode = #tpu.pipeline_mode<synchronous>, transform_indices = @transform_11, window_bounds = array<i64: 128, 32>}, {pipeline_mode = #tpu.pipeline_mode<synchronous>, transform_indices = @transform_12, window_bounds = array<i64: 1, 32>}, {transform_indices = @transform_13, window_bounds = array<i64: 8, 32>}]} {
    %c0 = arith.constant 0 : index
    %c0_0 = arith.constant 0 : index
    %0 = vector.load %arg1[%c0, %c0_0] : memref<8x128xbf16, #tpu.memory_space<vmem>>, vector<8x128xbf16>
    %c0_1 = arith.constant 0 : index
    %c0_2 = arith.constant 0 : index
    %1 = vector.load %arg2[%c0_1, %c0_2] : memref<128x128xbf16, #tpu.memory_space<vmem>>, vector<128x128xbf16>
    %cst = arith.constant dense<0.000000e+00> : vector<8x128xf32>
    %2 = tpu.matmul %0, %1, %cst {dimension_numbers = #tpu.dot_dimension_numbers<[1], [0], [0], [1], [0, 0, 1, 1], [], []>} : vector<8x128xbf16>, vector<128x128xbf16>, vector<8x128xf32> -> vector<8x128xf32>
    %c0_3 = arith.constant 0 : index
    %c0_4 = arith.constant 0 : index
    %3 = vector.load %arg3[%c0_3, %c0_4] : memref<1x128xf32, #tpu.memory_space<vmem>>, vector<1x128xf32>
    %4 = vector.broadcast %3 : vector<1x128xf32> to vector<8x128xf32>
    %5 = arith.addf %2, %4 : vector<8x128xf32>
    %cst_5 = arith.constant 0.000000e+00 : f32
    %6 = vector.broadcast %cst_5 : f32 to vector<8x128xf32>
    %7 = arith.maximumf %5, %6 : vector<8x128xf32>
    %8 = arith.truncf %7 : vector<8x128xf32> to vector<8x128xbf16>
    %c0_6 = arith.constant 0 : index
    %c0_7 = arith.constant 0 : index
    %9 = vector.load %arg4[%c0_6, %c0_7] : memref<128x64xbf16, #tpu.memory_space<vmem>>, vector<128x64xbf16>
    %cst_8 = arith.constant dense<0.000000e+00> : vector<8x64xf32>
    %10 = tpu.matmul %8, %9, %cst_8 {dimension_numbers = #tpu.dot_dimension_numbers<[1], [0], [0], [1], [0, 0, 1, 1], [], []>} : vector<8x128xbf16>, vector<128x64xbf16>, vector<8x64xf32> -> vector<8x64xf32>
    %c0_9 = arith.constant 0 : index
    %c0_10 = arith.constant 0 : index
    %11 = vector.load %arg5[%c0_9, %c0_10] : memref<1x64xf32, #tpu.memory_space<vmem>>, vector<1x64xf32>
    %12 = vector.broadcast %11 : vector<1x64xf32> to vector<8x64xf32>
    %13 = arith.addf %10, %12 : vector<8x64xf32>
    %cst_11 = arith.constant 0.000000e+00 : f32
    %14 = vector.broadcast %cst_11 : f32 to vector<8x64xf32>
    %15 = arith.maximumf %13, %14 : vector<8x64xf32>
    %16 = arith.truncf %15 : vector<8x64xf32> to vector<8x64xbf16>
    %c0_12 = arith.constant 0 : index
    %c0_13 = arith.constant 0 : index
    %17 = vector.load %arg6[%c0_12, %c0_13] : memref<64x16xbf16, #tpu.memory_space<vmem>>, vector<64x16xbf16>
    %cst_14 = arith.constant dense<0.000000e+00> : vector<8x16xf32>
    %18 = tpu.matmul %16, %17, %cst_14 {dimension_numbers = #tpu.dot_dimension_numbers<[1], [0], [0], [1], [0, 0, 1, 1], [], []>} : vector<8x64xbf16>, vector<64x16xbf16>, vector<8x16xf32> -> vector<8x16xf32>
    %c0_15 = arith.constant 0 : index
    %c0_16 = arith.constant 0 : index
    %19 = vector.load %arg7[%c0_15, %c0_16] : memref<1x16xf32, #tpu.memory_space<vmem>>, vector<1x16xf32>
    %20 = vector.broadcast %19 : vector<1x16xf32> to vector<8x16xf32>
    %21 = arith.addf %18, %20 : vector<8x16xf32>
    %cst_17 = arith.constant 0.000000e+00 : f32
    %22 = vector.broadcast %cst_17 : f32 to vector<8x16xf32>
    %23 = arith.maximumf %21, %22 : vector<8x16xf32>
    %24 = arith.truncf %23 : vector<8x16xf32> to vector<8x16xbf16>
    %c0_18 = arith.constant 0 : index
    %c0_19 = arith.constant 0 : index
    %25 = vector.load %arg8[%c0_18, %c0_19] : memref<16x64xbf16, #tpu.memory_space<vmem>>, vector<16x64xbf16>
    %cst_20 = arith.constant dense<0.000000e+00> : vector<8x64xf32>
    %26 = tpu.matmul %24, %25, %cst_20 {dimension_numbers = #tpu.dot_dimension_numbers<[1], [0], [0], [1], [0, 0, 1, 1], [], []>} : vector<8x16xbf16>, vector<16x64xbf16>, vector<8x64xf32> -> vector<8x64xf32>
    %c0_21 = arith.constant 0 : index
    %c0_22 = arith.constant 0 : index
    %27 = vector.load %arg9[%c0_21, %c0_22] : memref<1x64xf32, #tpu.memory_space<vmem>>, vector<1x64xf32>
    %28 = vector.broadcast %27 : vector<1x64xf32> to vector<8x64xf32>
    %29 = arith.addf %26, %28 : vector<8x64xf32>
    %cst_23 = arith.constant 0.000000e+00 : f32
    %30 = vector.broadcast %cst_23 : f32 to vector<8x64xf32>
    %31 = arith.maximumf %29, %30 : vector<8x64xf32>
    %32 = arith.truncf %31 : vector<8x64xf32> to vector<8x64xbf16>
    %c0_24 = arith.constant 0 : index
    %c0_25 = arith.constant 0 : index
    %33 = vector.load %arg10[%c0_24, %c0_25] : memref<64x128xbf16, #tpu.memory_space<vmem>>, vector<64x128xbf16>
    %cst_26 = arith.constant dense<0.000000e+00> : vector<8x128xf32>
    %34 = tpu.matmul %32, %33, %cst_26 {dimension_numbers = #tpu.dot_dimension_numbers<[1], [0], [0], [1], [0, 0, 1, 1], [], []>} : vector<8x64xbf16>, vector<64x128xbf16>, vector<8x128xf32> -> vector<8x128xf32>
    %c0_27 = arith.constant 0 : index
    %c0_28 = arith.constant 0 : index
    %35 = vector.load %arg11[%c0_27, %c0_28] : memref<1x128xf32, #tpu.memory_space<vmem>>, vector<1x128xf32>
    %36 = vector.broadcast %35 : vector<1x128xf32> to vector<8x128xf32>
    %37 = arith.addf %34, %36 : vector<8x128xf32>
    %cst_29 = arith.constant 0.000000e+00 : f32
    %38 = vector.broadcast %cst_29 : f32 to vector<8x128xf32>
    %39 = arith.maximumf %37, %38 : vector<8x128xf32>
    %40 = arith.truncf %39 : vector<8x128xf32> to vector<8x128xbf16>
    %c0_30 = arith.constant 0 : index
    %c0_31 = arith.constant 0 : index
    %41 = vector.load %arg12[%c0_30, %c0_31] : memref<128x32xbf16, #tpu.memory_space<vmem>>, vector<128x32xbf16>
    %cst_32 = arith.constant dense<0.000000e+00> : vector<8x32xf32>
    %42 = tpu.matmul %40, %41, %cst_32 {dimension_numbers = #tpu.dot_dimension_numbers<[1], [0], [0], [1], [0, 0, 1, 1], [], []>} : vector<8x128xbf16>, vector<128x32xbf16>, vector<8x32xf32> -> vector<8x32xf32>
    %c0_33 = arith.constant 0 : index
    %c0_34 = arith.constant 0 : index
    %43 = vector.load %arg13[%c0_33, %c0_34] : memref<1x32xf32, #tpu.memory_space<vmem>>, vector<1x32xf32>
    %44 = vector.broadcast %43 : vector<1x32xf32> to vector<8x32xf32>
    %45 = arith.addf %42, %44 : vector<8x32xf32>
    %c0_35 = arith.constant 0 : index
    %c0_36 = arith.constant 0 : index
    %46 = vector.load %arg14[%c0_35, %c0_36] : memref<8x32xf32, #tpu.memory_space<vmem>>, vector<8x32xf32>
    tpu.vector_store %arg14[%c0_35, %c0_36], %45 {strides = array<i32>} : memref<8x32xf32, #tpu.memory_space<vmem>>, vector<8x32xf32>,
    return
  }
  func.func @transform_0(%arg0: i32) -> (i32, i32) {
    %c0_i32 = arith.constant 0 : i32
    %c0_i32_0 = arith.constant 0 : i32
    return %arg0, %c0_i32 : i32, i32
  }
  func.func @transform_1(%arg0: i32) -> (i32, i32) {
    %c0_i32 = arith.constant 0 : i32
    %c0_i32_0 = arith.constant 0 : i32
    %c0_i32_1 = arith.constant 0 : i32
    return %c0_i32, %c0_i32_0 : i32, i32
  }
  func.func @transform_2(%arg0: i32) -> (i32, i32) {
    %c0_i32 = arith.constant 0 : i32
    %c0_i32_0 = arith.constant 0 : i32
    %c0_i32_1 = arith.constant 0 : i32
    return %c0_i32, %c0_i32_0 : i32, i32
  }
  func.func @transform_3(%arg0: i32) -> (i32, i32) {
    %c0_i32 = arith.constant 0 : i32
    %c0_i32_0 = arith.constant 0 : i32
    %c0_i32_1 = arith.constant 0 : i32
    return %c0_i32, %c0_i32_0 : i32, i32
  }
  func.func @transform_4(%arg0: i32) -> (i32, i32) {
    %c0_i32 = arith.constant 0 : i32
    %c0_i32_0 = arith.constant 0 : i32
    %c0_i32_1 = arith.constant 0 : i32
    return %c0_i32, %c0_i32_0 : i32, i32
  }
  func.func @transform_5(%arg0: i32) -> (i32, i32) {
    %c0_i32 = arith.constant 0 : i32
    %c0_i32_0 = arith.constant 0 : i32
    %c0_i32_1 = arith.constant 0 : i32
    return %c0_i32, %c0_i32_0 : i32, i32
  }
  func.func @transform_6(%arg0: i32) -> (i32, i32) {
    %c0_i32 = arith.constant 0 : i32
    %c0_i32_0 = arith.constant 0 : i32
    %c0_i32_1 = arith.constant 0 : i32
    return %c0_i32, %c0_i32_0 : i32, i32
  }
  func.func @transform_7(%arg0: i32) -> (i32, i32) {
    %c0_i32 = arith.constant 0 : i32
    %c0_i32_0 = arith.constant 0 : i32
    %c0_i32_1 = arith.constant 0 : i32
    return %c0_i32, %c0_i32_0 : i32, i32
  }
  func.func @transform_8(%arg0: i32) -> (i32, i32) {
    %c0_i32 = arith.constant 0 : i32
    %c0_i32_0 = arith.constant 0 : i32
    %c0_i32_1 = arith.constant 0 : i32
    return %c0_i32, %c0_i32_0 : i32, i32
  }
  func.func @transform_9(%arg0: i32) -> (i32, i32) {
    %c0_i32 = arith.constant 0 : i32
    %c0_i32_0 = arith.constant 0 : i32
    %c0_i32_1 = arith.constant 0 : i32
    return %c0_i32, %c0_i32_0 : i32, i32
  }
  func.func @transform_10(%arg0: i32) -> (i32, i32) {
    %c0_i32 = arith.constant 0 : i32
    %c0_i32_0 = arith.constant 0 : i32
    %c0_i32_1 = arith.constant 0 : i32
    return %c0_i32, %c0_i32_0 : i32, i32
  }
  func.func @transform_11(%arg0: i32) -> (i32, i32) {
    %c0_i32 = arith.constant 0 : i32
    %c0_i32_0 = arith.constant 0 : i32
    %c0_i32_1 = arith.constant 0 : i32
    return %c0_i32, %c0_i32_0 : i32, i32
  }
  func.func @transform_12(%arg0: i32) -> (i32, i32) {
    %c0_i32 = arith.constant 0 : i32
    %c0_i32_0 = arith.constant 0 : i32
    %c0_i32_1 = arith.constant 0 : i32
    return %c0_i32, %c0_i32_0 : i32, i32
  }
  func.func @transform_13(%arg0: i32) -> (i32, i32) {
    %c0_i32 = arith.constant 0 : i32
    %c0_i32_0 = arith.constant 0 : i32
    return %arg0, %c0_i32 : i32, i32
  }
}

</mosaic_0001>

<llo_original>
// kernel: tpu_custom_call.1
$region0: #{tpu_custom_call.1}
  #allocation0 [shape = 'u32[]', space=smem, size = 0x4, offset = 0x4, fixed_abs, tag = 'smem constant byte address 0x4 - core index']
  #allocation1 [shape = 'u32[72,128]{1,0:T(1,128)}', space=vmem, size = 0x9000, scoped, tag = 'internal scratch']
  %s0 = inlined_call_operand.vmem [shape: bf16[8,128], index: 0, kind: input, shape index: {}]
  %s1 = inlined_call_operand.vmem [shape: bf16[128,128], index: 1, kind: input, shape index: {}]
  %s2 = inlined_call_operand.vmem [shape: f32[1,128], index: 2, kind: input, shape index: {}]
  %s3 = inlined_call_operand.vmem [shape: bf16[128,64], index: 3, kind: input, shape index: {}]
  %s4 = inlined_call_operand.vmem [shape: f32[1,64], index: 4, kind: input, shape index: {}]
  %s5 = inlined_call_operand.vmem [shape: bf16[64,16], index: 5, kind: input, shape index: {}]
  %s6 = inlined_call_operand.vmem [shape: f32[1,16], index: 6, kind: input, shape index: {}]
  %s7 = inlined_call_operand.vmem [shape: bf16[16,64], index: 7, kind: input, shape index: {}]
  %s8 = inlined_call_operand.vmem [shape: f32[1,64], index: 8, kind: input, shape index: {}]
  %s9 = inlined_call_operand.vmem [shape: bf16[64,128], index: 9, kind: input, shape index: {}]
  %s10 = inlined_call_operand.vmem [shape: f32[1,128], index: 10, kind: input, shape index: {}]
  %s11 = inlined_call_operand.vmem [shape: bf16[128,32], index: 11, kind: input, shape index: {}]
  %s12 = inlined_call_operand.vmem [shape: f32[1,32], index: 12, kind: input, shape index: {}]
  %s13 = inlined_call_operand.hbm [shape: f32[8,32], index: 13, kind: output, shape index: {}]
  %s14 = sld [smem:[#allocation0]]
  $region62: #{tpu_custom_call.1} parent=0
    _
  %s16 = ssub.s32 1, %s14
  %s17 = scalar_select 0, %s16, %s14
  $region1: #{tpu_custom_call.1} parent=0
    #allocation2 [shape = 'u8[4096]{0}', space=vmem, size = 0x1000, scoped, tag = 'output window, operand 0, single buffered']
    #allocation3 [shape = 's32[1]{0}', space=sflag, size = 0x4, scoped, tag = 'scoped memory for tpu_custom_call.1']
    %18 = vsyncpa [#allocation3], 0
    // Predicated region
    $region2: #{tpu_custom_call.1} parent=1 // pred_check
      _
    $region3: #{tpu_custom_call.1} parent=1 // pred_check_branch
      %20 = sbr.rel (0) target = $region5
    $region4: #{tpu_custom_call.1} parent=1 // pred_region
      _
    $region5: #{tpu_custom_call.1} parent=1 // pred_fallthru
      _
    // Predicated region
    $region6: #{tpu_custom_call.1} parent=1 // pred_check
      _
    $region7: #{tpu_custom_call.1} parent=1 // pred_check_branch
      %22 = sbr.rel (0) target = $region9
    $region8: #{tpu_custom_call.1} parent=1 // pred_region
      _
    $region9: #{tpu_custom_call.1} parent=1 // pred_fallthru
      _
    // Predicated region
    $region10: #{tpu_custom_call.1} parent=1 // pred_check
      _
    $region11: #{tpu_custom_call.1} parent=1 // pred_check_branch
      %24 = sbr.rel (0) target = $region13
    $region12: #{tpu_custom_call.1} parent=1 // pred_region
      _
    $region13: #{tpu_custom_call.1} parent=1 // pred_fallthru
      _
    // Predicated region
    $region14: #{tpu_custom_call.1} parent=1 // pred_check
      _
    $region15: #{tpu_custom_call.1} parent=1 // pred_check_branch
      %26 = sbr.rel (0) target = $region17
    $region16: #{tpu_custom_call.1} parent=1 // pred_region
      _
    $region17: #{tpu_custom_call.1} parent=1 // pred_fallthru
      _
    // Predicated region
    $region18: #{tpu_custom_call.1} parent=1 // pred_check
      _
    $region19: #{tpu_custom_call.1} parent=1 // pred_check_branch
      %28 = sbr.rel (0) target = $region21
    $region20: #{tpu_custom_call.1} parent=1 // pred_region
      _
    $region21: #{tpu_custom_call.1} parent=1 // pred_fallthru
      _
    // Predicated region
    $region22: #{tpu_custom_call.1} parent=1 // pred_check
      _
    $region23: #{tpu_custom_call.1} parent=1 // pred_check_branch
      %30 = sbr.rel (0) target = $region25
    $region24: #{tpu_custom_call.1} parent=1 // pred_region
      _
    $region25: #{tpu_custom_call.1} parent=1 // pred_fallthru
      _
    // Predicated region
    $region26: #{tpu_custom_call.1} parent=1 // pred_check
      _
    $region27: #{tpu_custom_call.1} parent=1 // pred_check_branch
      %32 = sbr.rel (0) target = $region29
    $region28: #{tpu_custom_call.1} parent=1 // pred_region
      _
    $region29: #{tpu_custom_call.1} parent=1 // pred_fallthru
      _
    // Predicated region
    $region30: #{tpu_custom_call.1} parent=1 // pred_check
      _
    $region31: #{tpu_custom_call.1} parent=1 // pred_check_branch
      %34 = sbr.rel (0) target = $region33
    $region32: #{tpu_custom_call.1} parent=1 // pred_region
      _
    $region33: #{tpu_custom_call.1} parent=1 // pred_fallthru
      _
    // Predicated region
    $region34: #{tpu_custom_call.1} parent=1 // pred_check
      _
    $region35: #{tpu_custom_call.1} parent=1 // pred_check_branch
      %36 = sbr.rel (0) target = $region37
    $region36: #{tpu_custom_call.1} parent=1 // pred_region
      _
    $region37: #{tpu_custom_call.1} parent=1 // pred_fallthru
      _
    // Predicated region
    $region38: #{tpu_custom_call.1} parent=1 // pred_check
      _
    $region39: #{tpu_custom_call.1} parent=1 // pred_check_branch
      %38 = sbr.rel (0) target = $region41
    $region40: #{tpu_custom_call.1} parent=1 // pred_region
      _
    $region41: #{tpu_custom_call.1} parent=1 // pred_fallthru
      _
    // Predicated region
    $region42: #{tpu_custom_call.1} parent=1 // pred_check
      _
    $region43: #{tpu_custom_call.1} parent=1 // pred_check_branch
      %40 = sbr.rel (0) target = $region45
    $region44: #{tpu_custom_call.1} parent=1 // pred_region
      _
    $region45: #{tpu_custom_call.1} parent=1 // pred_fallthru
      _
    // Predicated region
    $region46: #{tpu_custom_call.1} parent=1 // pred_check
      _
    $region47: #{tpu_custom_call.1} parent=1 // pred_check_branch
      %42 = sbr.rel (0) target = $region49
    $region48: #{tpu_custom_call.1} parent=1 // pred_region
      _
    $region49: #{tpu_custom_call.1} parent=1 // pred_fallthru
      _
    // Predicated region
    $region50: #{tpu_custom_call.1} parent=1 // pred_check
      _
    $region51: #{tpu_custom_call.1} parent=1 // pred_check_branch
      %44 = sbr.rel (0) target = $region53
    $region52: #{tpu_custom_call.1} parent=1 // pred_region
      _
    $region53: #{tpu_custom_call.1} parent=1 // pred_fallthru
      _
    %v46 = vld [vmem:[%s0] sm:$0xf]
    %v47 = vld [vmem:[%s1] sm:$0xf]
    %v48 = vld [vmem:[%s1 + $0x4] sm:$0xf]
    %v49 = vld [vmem:[%s1 + $0x8] sm:$0xf]
    %v50 = vld [vmem:[%s1 + $0xc] sm:$0xf]
    %v51 = vld [vmem:[%s1 + $0x10] sm:$0xf]
    %v52 = vld [vmem:[%s1 + $0x14] sm:$0xf]
    %v53 = vld [vmem:[%s1 + $0x18] sm:$0xf]
    %v54 = vld [vmem:[%s1 + $0x1c] sm:$0xf]
    %v55 = vld [vmem:[%s1 + $0x20] sm:$0xf]
    %v56 = vld [vmem:[%s1 + $0x24] sm:$0xf]
    %v57 = vld [vmem:[%s1 + $0x28] sm:$0xf]
    %v58 = vld [vmem:[%s1 + $0x2c] sm:$0xf]
    %v59 = vld [vmem:[%s1 + $0x30] sm:$0xf]
    %v60 = vld [vmem:[%s1 + $0x34] sm:$0xf]
    %v61 = vld [vmem:[%s1 + $0x38] sm:$0xf]
    %v62 = vld [vmem:[%s1 + $0x3c] sm:$0xf]
    %v63 = vld [vmem:[%s2] sm:$0x1]
    %v65 = vperm.slane %v63, 0
    %v83 = vunpack.c.l.b16 %v47
    %v84 = vunpack.c.l.b16 %v48
    %v85 = vunpack.c.l.b16 %v49
    %v86 = vunpack.c.l.b16 %v50
    %v87 = vunpack.c.l.b16 %v51
    %v88 = vunpack.c.l.b16 %v52
    %v89 = vunpack.c.l.b16 %v53
    %v90 = vunpack.c.l.b16 %v54
    %v91 = vunpack.c.l.b16 %v55
    %v92 = vunpack.c.l.b16 %v56
    %v93 = vunpack.c.l.b16 %v57
    %v94 = vunpack.c.l.b16 %v58
    %v95 = vunpack.c.l.b16 %v59
    %v96 = vunpack.c.l.b16 %v60
    %v97 = vunpack.c.l.b16 %v61
    %v98 = vunpack.c.l.b16 %v62
    %v99 = vpack.c.b16 %v84, %v83
    %v100 = vpack.c.b16 %v86, %v85
    %v101 = vpack.c.b16 %v88, %v87
    %v102 = vpack.c.b16 %v90, %v89
    %v103 = vpack.c.b16 %v92, %v91
    %v104 = vpack.c.b16 %v94, %v93
    %v105 = vpack.c.b16 %v96, %v95
    %v106 = vpack.c.b16 %v98, %v97
    %115 = vmatpush.bf16.msra.mxu0 %v106
    %116 = vmatpush.bf16.msra.mxu0 %v105
    %117 = vmatpush.bf16.msra.mxu0 %v104
    %118 = vmatpush.bf16.msra.mxu0 %v103
    %119 = vmatpush.bf16.msra.mxu0 %v102
    %120 = vmatpush.bf16.msra.mxu0 %v101
    %121 = vmatpush.bf16.msra.mxu0 %v100
    %122 = vmatpush.bf16.msra.mxu0 %v99
    %123 = vmatmul.bf16.gmra.mxu0 %v46
    %v124 = vpop.f32.mrf.mxu0
    %v125 = vadd.f32 %v65, %v124
    %v126 = vpop.f32.mrf.mxu0
    %127 = vdwg.mxu0
    %v128 = vmax.f32 %v125, 0.0
    %v129 = vpack.c.bf16 %v128, %v128
    %v130 = vld [vmem:[%s3] sm:$0xf]
    %v131 = vld [vmem:[%s3 + $0x4] sm:$0xf]
    %v132 = vld [vmem:[%s3 + $0x8] sm:$0xf]
    %v133 = vld [vmem:[%s3 + $0xc] sm:$0xf]
    %v134 = vld [vmem:[%s3 + $0x10] sm:$0xf]
    %v135 = vld [vmem:[%s3 + $0x14] sm:$0xf]
    %v136 = vld [vmem:[%s3 + $0x18] sm:$0xf]
    %v137 = vld [vmem:[%s3 + $0x1c] sm:$0xf]
    %v138 = vld [vmem:[%s3 + $0x20] sm:$0xf]
    %v139 = vld [vmem:[%s3 + $0x24] sm:$0xf]
    %v140 = vld [vmem:[%s3 + $0x28] sm:$0xf]
    %v141 = vld [vmem:[%s3 + $0x2c] sm:$0xf]
    %v142 = vld [vmem:[%s3 + $0x30] sm:$0xf]
    %v143 = vld [vmem:[%s3 + $0x34] sm:$0xf]
    %v144 = vld [vmem:[%s3 + $0x38] sm:$0xf]
    %v145 = vld [vmem:[%s3 + $0x3c] sm:$0xf]
    %v146 = vld [vmem:[%s4] sm:$0x1]
    %v148 = vperm.slane %v146, 0
    %v166 = vunpack.c.l.b16 %v130
    %v167 = vunpack.c.l.b16 %v131
    %v168 = vunpack.c.l.b16 %v132
    %v169 = vunpack.c.l.b16 %v133
    %v170 = vunpack.c.l.b16 %v134
    %v171 = vunpack.c.l.b16 %v135
    %v172 = vunpack.c.l.b16 %v136
    %v173 = vunpack.c.l.b16 %v137
    %v174 = vunpack.c.l.b16 %v138
    %v175 = vunpack.c.l.b16 %v139
    %v176 = vunpack.c.l.b16 %v140
    %v177 = vunpack.c.l.b16 %v141
    %v178 = vunpack.c.l.b16 %v142
    %v179 = vunpack.c.l.b16 %v143
    %v180 = vunpack.c.l.b16 %v144
    %v181 = vunpack.c.l.b16 %v145
    %v182 = vpack.c.b16 %v167, %v166
    %v183 = vpack.c.b16 %v169, %v168
    %v184 = vpack.c.b16 %v171, %v170
    %v185 = vpack.c.b16 %v173, %v172
    %v186 = vpack.c.b16 %v175, %v174
    %v187 = vpack.c.b16 %v177, %v176
    %v188 = vpack.c.b16 %v179, %v178
    %v189 = vpack.c.b16 %v181, %v180
    %198 = vmatpush.bf16.msra.mxu0 %v189
    %199 = vmatpush.bf16.msra.mxu0 %v188
    %200 = vmatpush.bf16.msra.mxu0 %v187
    %201 = vmatpush.bf16.msra.mxu0 %v186
    %202 = vmatpush.bf16.msra.mxu0 %v185
    %203 = vmatpush.bf16.msra.mxu0 %v184
    %204 = vmatpush.bf16.msra.mxu0 %v183
    %205 = vmatpush.bf16.msra.mxu0 %v182
    %206 = vmatmul.bf16.gmra.mxu0 %v129
    %v207 = vpop.f32.mrf.mxu0
    %v208 = vadd.f32 %v148, %v207
    %v209 = vpop.f32.mrf.mxu0
    %210 = vdwg.mxu0
    %v211 = vmax.f32 %v208, 0.0
    %v212 = vpack.c.bf16 %v211, %v211
    %v213 = vld [vmem:[%s5] sm:$0xf]
    %v214 = vld [vmem:[%s5 + $0x4] sm:$0xf]
    %v215 = vld [vmem:[%s5 + $0x8] sm:$0xf]
    %v216 = vld [vmem:[%s5 + $0xc] sm:$0xf]
    %v217 = vld [vmem:[%s5 + $0x10] sm:$0xf]
    %v218 = vld [vmem:[%s5 + $0x14] sm:$0xf]
    %v219 = vld [vmem:[%s5 + $0x18] sm:$0xf]
    %v220 = vld [vmem:[%s5 + $0x1c] sm:$0xf]
    %v221 = vld [vmem:[%s6] sm:$0x1]
    %v223 = vperm.slane %v221, 0
    %v233 = vunpack.c.l.b16 %v213
    %v234 = vunpack.c.l.b16 %v214
    %v235 = vunpack.c.l.b16 %v215
    %v236 = vunpack.c.l.b16 %v216
    %v237 = vunpack.c.l.b16 %v217
    %v238 = vunpack.c.l.b16 %v218
    %v239 = vunpack.c.l.b16 %v219
    %v240 = vunpack.c.l.b16 %v220
    %v241 = vpack.c.b16 %v234, %v233
    %v242 = vpack.c.b16 %v236, %v235
    %v243 = vpack.c.b16 %v238, %v237
    %v244 = vpack.c.b16 %v240, %v239
    %vm249 = vcmask 523264
    %v251 = vsel %vm249, %v212, 0
    %253 = vmatpush.bf16.msra.mxu0 0
    %254 = vmatpush.bf16.msra.mxu0 0
    %255 = vmatpush.bf16.msra.mxu0 0
    %256 = vmatpush.bf16.msra.mxu0 0
    %257 = vmatpush.bf16.msra.mxu0 %v244
    %258 = vmatpush.bf16.msra.mxu0 %v243
    %259 = vmatpush.bf16.msra.mxu0 %v242
    %260 = vmatpush.bf16.msra.mxu0 %v241
    %261 = vmatmul.bf16.gmra.mxu0 %v251
    %v262 = vpop.f32.mrf.mxu0
    %v263 = vadd.f32 %v223, %v262
    %v264 = vpop.f32.mrf.mxu0
    %265 = vdwg.mxu0
    %v266 = vmax.f32 %v263, 0.0
    %v267 = vpack.c.bf16 %v266, %v266
    %v268 = vld [vmem:[%s7] sm:$0xf]
    %v269 = vld [vmem:[%s7 + $0x4] sm:$0xf]
    %v270 = vld [vmem:[%s8] sm:$0x1]
    %v272 = vperm.slane %v270, 0
    %v276 = vunpack.c.l.b16 %v268
    %v277 = vunpack.c.l.b16 %v269
    %v278 = vpack.c.b16 %v277, %v276
    %vm280 = vcmask 130048
    %v282 = vsel %vm280, %v267, 0
    %284 = vmatpush.bf16.msra.mxu0 0
    %285 = vmatpush.bf16.msra.mxu0 0
    %286 = vmatpush.bf16.msra.mxu0 0
    %287 = vmatpush.bf16.msra.mxu0 0
    %288 = vmatpush.bf16.msra.mxu0 0
    %289 = vmatpush.bf16.msra.mxu0 0
    %290 = vmatpush.bf16.msra.mxu0 0
    %291 = vmatpush.bf16.msra.mxu0 %v278
    %292 = vmatmul.bf16.gmra.mxu0 %v282
    %v293 = vpop.f32.mrf.mxu0
    %v294 = vadd.f32 %v272, %v293
    %v295 = vpop.f32.mrf.mxu0
    %296 = vdwg.mxu0
    %v297 = vmax.f32 %v294, 0.0
    %v298 = vpack.c.bf16 %v297, %v297
    %v299 = vld [vmem:[%s9] sm:$0xf]
    %v300 = vld [vmem:[%s9 + $0x4] sm:$0xf]
    %v301 = vld [vmem:[%s9 + $0x8] sm:$0xf]
    %v302 = vld [vmem:[%s9 + $0xc] sm:$0xf]
    %v303 = vld [vmem:[%s9 + $0x10] sm:$0xf]
    %v304 = vld [vmem:[%s9 + $0x14] sm:$0xf]
    %v305 = vld [vmem:[%s9 + $0x18] sm:$0xf]
    %v306 = vld [vmem:[%s9 + $0x1c] sm:$0xf]
    %v307 = vld [vmem:[%s10] sm:$0x1]
    %v309 = vperm.slane %v307, 0
    %v319 = vunpack.c.l.b16 %v299
    %v320 = vunpack.c.l.b16 %v300
    %v321 = vunpack.c.l.b16 %v301
    %v322 = vunpack.c.l.b16 %v302
    %v323 = vunpack.c.l.b16 %v303
    %v324 = vunpack.c.l.b16 %v304
    %v325 = vunpack.c.l.b16 %v305
    %v326 = vunpack.c.l.b16 %v306
    %v327 = vpack.c.b16 %v320, %v319
    %v328 = vpack.c.b16 %v322, %v321
    %v329 = vpack.c.b16 %v324, %v323
    %v330 = vpack.c.b16 %v326, %v325
    %v336 = vsel %vm249, %v298, 0
    %338 = vmatpush.bf16.msra.mxu0 0
    %339 = vmatpush.bf16.msra.mxu0 0
    %340 = vmatpush.bf16.msra.mxu0 0
    %341 = vmatpush.bf16.msra.mxu0 0
    %342 = vmatpush.bf16.msra.mxu0 %v330
    %343 = vmatpush.bf16.msra.mxu0 %v329
    %344 = vmatpush.bf16.msra.mxu0 %v328
    %345 = vmatpush.bf16.msra.mxu0 %v327
    %346 = vmatmul.bf16.gmra.mxu0 %v336
    %v347 = vpop.f32.mrf.mxu0
    %v348 = vadd.f32 %v309, %v347
    %v349 = vpop.f32.mrf.mxu0
    %350 = vdwg.mxu0
    %v351 = vmax.f32 %v348, 0.0
    %v352 = vpack.c.bf16 %v351, %v351
    %v353 = vld [vmem:[%s11] sm:$0xf]
    %v354 = vld [vmem:[%s11 + $0x4] sm:$0xf]
    %v355 = vld [vmem:[%s11 + $0x8] sm:$0xf]
    %v356 = vld [vmem:[%s11 + $0xc] sm:$0xf]
    %v357 = vld [vmem:[%s11 + $0x10] sm:$0xf]
    %v358 = vld [vmem:[%s11 + $0x14] sm:$0xf]
    %v359 = vld [vmem:[%s11 + $0x18] sm:$0xf]
    %v360 = vld [vmem:[%s11 + $0x1c] sm:$0xf]
    %v361 = vld [vmem:[%s11 + $0x20] sm:$0xf]
    %v362 = vld [vmem:[%s11 + $0x24] sm:$0xf]
    %v363 = vld [vmem:[%s11 + $0x28] sm:$0xf]
    %v364 = vld [vmem:[%s11 + $0x2c] sm:$0xf]
    %v365 = vld [vmem:[%s11 + $0x30] sm:$0xf]
    %v366 = vld [vmem:[%s11 + $0x34] sm:$0xf]
    %v367 = vld [vmem:[%s11 + $0x38] sm:$0xf]
    %v368 = vld [vmem:[%s11 + $0x3c] sm:$0xf]
    %v369 = vld [vmem:[%s12] sm:$0x1]
    %v371 = vperm.slane %v369, 0
    %v389 = vunpack.c.l.b16 %v353
    %v390 = vunpack.c.l.b16 %v354
    %v391 = vunpack.c.l.b16 %v355
    %v392 = vunpack.c.l.b16 %v356
    %v393 = vunpack.c.l.b16 %v357
    %v394 = vunpack.c.l.b16 %v358
    %v395 = vunpack.c.l.b16 %v359
    %v396 = vunpack.c.l.b16 %v360
    %v397 = vunpack.c.l.b16 %v361
    %v398 = vunpack.c.l.b16 %v362
    %v399 = vunpack.c.l.b16 %v363
    %v400 = vunpack.c.l.b16 %v364
    %v401 = vunpack.c.l.b16 %v365
    %v402 = vunpack.c.l.b16 %v366
    %v403 = vunpack.c.l.b16 %v367
    %v404 = vunpack.c.l.b16 %v368
    %v405 = vpack.c.b16 %v390, %v389
    %v406 = vpack.c.b16 %v392, %v391
    %v407 = vpack.c.b16 %v394, %v393
    %v408 = vpack.c.b16 %v396, %v395
    %v409 = vpack.c.b16 %v398, %v397
    %v410 = vpack.c.b16 %v400, %v399
    %v411 = vpack.c.b16 %v402, %v401
    %v412 = vpack.c.b16 %v404, %v403
    %421 = vmatpush.bf16.msra.mxu0 %v412
    %422 = vmatpush.bf16.msra.mxu0 %v411
    %423 = vmatpush.bf16.msra.mxu0 %v410
    %424 = vmatpush.bf16.msra.mxu0 %v409
    %425 = vmatpush.bf16.msra.mxu0 %v408
    %426 = vmatpush.bf16.msra.mxu0 %v407
    %427 = vmatpush.bf16.msra.mxu0 %v406
    %428 = vmatpush.bf16.msra.mxu0 %v405
    %429 = vmatmul.bf16.gmra.mxu0 %v352
    %v430 = vpop.f32.mrf.mxu0
    %v431 = vadd.f32 %v371, %v430
    %v432 = vpop.f32.mrf.mxu0
    %433 = vdwg.mxu0
    %vm434 = vcmask 261120
    %435 = vst.msk [vmem:[#allocation2] sm:$0xff] %vm434, %v431
    // Predicated region
    $region54: #{tpu_custom_call.1} parent=1 // pred_check
      _
    $region55: #{tpu_custom_call.1} parent=1 // pred_check_branch
      %437 = sbr.rel (0) target = $region57
    $region56: #{tpu_custom_call.1} parent=1 // pred_region
      %439 = vsyncadd [#allocation3], 0
      %s441 = sshll.u32 [#allocation2], 4
      %s442 = int_to_ptr.vmem [resolvable:$true] %s441
      %s443 = sshll.u32 %s13, 4
      %s444 = int_to_ptr.hbm [resolvable:$true] %s443
      %446 = dma.vmem_to_hbm [thread:$0]  %s442, 128, %s444, [#allocation3]
    $region57: #{tpu_custom_call.1} parent=1 // pred_fallthru
      _
    // Predicated region
    $region58: #{tpu_custom_call.1} parent=1 // pred_check
      _
    $region59: #{tpu_custom_call.1} parent=1 // pred_check_branch
      %448 = sbr.rel (0) target = $region61
    $region60: #{tpu_custom_call.1} parent=1 // pred_region
      %450 = dma.done [#allocation3], 128
    $region61: #{tpu_custom_call.1} parent=1 // pred_fallthru
      _
    %451 = vsyncpa [#allocation3], 1

</llo_original>
